<compile_context>
chip_gen: v7x
topology: tpu7x:2x2x1
jax: 0.10.0
libtpu: 0.0.40
codegen_flags: <defaults>
</compile_context>

<pallas_src>
import functools

import jax
import jax.numpy as jnp
from jax.experimental import pallas as pl
from jax.experimental.pallas import tpu as pltpu


def _patch_embed_kernel(x_ref, w_ref, b_ref, o_ref):
    # x_ref: (TM, K)  compute-dtype patch tile (streamed per grid step)
    # w_ref: (K, N)   compute-dtype projection weight (resident across grid)
    # b_ref: (1, N)   f32 bias (resident)
    # o_ref: (TM, N)  output tile; N == dim_embed (unpadded), so only the last
    #                 partial 128-lane group uses masked stores.
    acc = jnp.dot(x_ref[...], w_ref[...], preferred_element_type=jnp.float32)
    o_ref[...] = (acc + b_ref[...]).astype(o_ref.dtype)


def _round_up(x, m):
    return (x + m - 1) // m * m


def _vmem_budgets():
    """(tile-sizing budget, explicit vmem_limit_bytes) for the actual part."""
    try:
        phys = int(pltpu.get_tpu_info().vmem_capacity_bytes)
    except Exception:
        phys = 64 * 1024 * 1024           # conservative default: v7x (smallest VMEM)
    # e.g. 48 MiB budget / 64 MiB limit on 128-MiB parts (v5e/v6e),
    #      24 MiB budget / 32 MiB limit on v7x.
    return (3 * phys) // 8, phys // 2


def _pick_tile_m(m, k, n, in_bytes, out_bytes, vmem_budget, min_steps=8):
    """Largest multiple-of-8 divisor of M whose double-buffered in/out tiles
    (plus the weight/bias blocks, counted double-buffered) fit the VMEM budget,
    capped so the grid keeps >= min_steps steps (pipelining + both v7x cores).
    Returns (tile_m, padded_m)."""
    resident = 2 * (k * n * in_bytes + n * 4)        # weight + bias, x2 buffers
    per_row = 2 * (k * in_bytes + n * out_bytes)     # x2 = double buffering
    vmem_rows = max(8, (vmem_budget - resident) // per_row)
    step_rows = max(8, m // min_steps)
    cap = int(min(vmem_rows, step_rows))
    if m % 8 == 0:
        t = cap - cap % 8
        while t >= 8:
            if m % t == 0:
                return t, m                          # divides M -> no padding
            t -= 8
    # Rare fallback (M not a multiple of 8): pad M up to a small tile multiple.
    tm = max(8, min(cap - cap % 8, 512)) if cap >= 8 else 8
    return tm, _round_up(m, tm)


def patch_embedding_forward(x, weight, bias, patch_dim,
                            compute_dtype=jnp.bfloat16,
                            out_dtype=jnp.bfloat16):
    """
    Args:
      x:      (B, C, H, W)            NCHW, like the PyTorch module
      weight: (dim_embed, C, ph, pw)  Conv2d weight (OIHW)
      bias:   (dim_embed,)            Conv2d bias
      patch_dim: (ph, pw)
    Returns:
      (B, num_patches, dim_embed) in out_dtype (bf16 by default).
    """
    B, C, H, W = x.shape
    ph, pw = patch_dim
    Hp, Wp = H // ph, W // pw
    num_patches = Hp * Wp
    K = C * ph * pw                  # dim_patch
    N = weight.shape[0]              # dim_embed
    M = B * num_patches

    # --- patchify glue: one fused XLA cast+transpose producing the bf16 patch
    #     matrix in (c, dh, dw) feature order (matches the flattened weight).
    # TODO(synk): fold this relayout into the kernel to remove its HBM round trip.
    xc = x.astype(compute_dtype)
    xp = xc.reshape(B, C, Hp, ph, Wp, pw)
    xp = jnp.transpose(xp, (0, 2, 4, 1, 3, 5))       # (B, Hp, Wp, C, ph, pw)
    patches = xp.reshape(M, K)

    w_mat = weight.reshape(N, K).T.astype(compute_dtype)   # (K, N), tiny
    b_mat = bias.astype(jnp.float32).reshape(1, N)         # (1, N)

    in_bytes = jnp.dtype(compute_dtype).itemsize
    out_bytes = jnp.dtype(out_dtype).itemsize
    tile_budget, vmem_limit = _vmem_budgets()
    tm, m_pad = _pick_tile_m(M, K, N, in_bytes, out_bytes, tile_budget)
    if m_pad != M:                                   # rare fallback only
        patches = jnp.pad(patches, ((0, m_pad - M), (0, 0)))

    out = pl.pallas_call(
        _patch_embed_kernel,
        out_shape=jax.ShapeDtypeStruct((m_pad, N), out_dtype),
        grid=(m_pad // tm,),
        in_specs=[
            pl.BlockSpec((tm, K), lambda i: (i, 0)),     # streamed patch rows
            pl.BlockSpec((K, N), lambda i: (0, 0)),      # resident weight
            pl.BlockSpec((1, N), lambda i: (0, 0)),      # resident bias
        ],
        out_specs=pl.BlockSpec((tm, N), lambda i: (i, 0)),
        compiler_params=pltpu.CompilerParams(
            # independent row tiles -> shard across both TensorCores on v7x
            dimension_semantics=("parallel",),
            vmem_limit_bytes=vmem_limit,
        ),
    )(patches, w_mat, b_mat)

    if m_pad != M:
        out = out[:M]
    return out.reshape(B, num_patches, N)


if __name__ == "__main__":
    # Small shapes consistent with the module's forward:
    # img_size=16, patch_dim=4, in_channels=4, dim_embed=32
    B, C, H, W = 2, 4, 16, 16
    ph = pw = 4
    dim_embed = 32

    key = jax.random.PRNGKey(0)
    kx, kw, kb = jax.random.split(key, 3)
    x = jax.random.normal(kx, (B, C, H, W), dtype=jnp.float32)
    weight = jax.random.normal(kw, (dim_embed, C, ph, pw), dtype=jnp.float32) * 0.02
    bias = jax.random.normal(kb, (dim_embed,), dtype=jnp.float32) * 0.02

    fwd = jax.jit(functools.partial(patch_embedding_forward, patch_dim=(ph, pw)))
    out = jax.block_until_ready(fwd(x, weight, bias))

    # Reference: strided conv with the same bf16-cast inputs (f32 accumulation),
    # einops 'b c h w -> b (h w) c' rearrange, then the same bf16 output cast.
    Hp, Wp = H // ph, W // pw
    ref_conv = jax.lax.conv_general_dilated(
        x.astype(jnp.bfloat16), weight.astype(jnp.bfloat16),
        window_strides=(ph, pw), padding="VALID",
        dimension_numbers=("NCHW", "OIHW", "NCHW"),
        preferred_element_type=jnp.float32,
    ) + bias.reshape(1, dim_embed, 1, 1)
    ref = jnp.transpose(ref_conv.reshape(B, dim_embed, Hp * Wp), (0, 2, 1))
    ref = ref.astype(jnp.bfloat16).astype(jnp.float32)

    assert out.shape == (B, Hp * Wp, dim_embed)
    assert out.dtype == jnp.bfloat16
    assert jnp.allclose(out.astype(jnp.float32), ref, atol=2e-2, rtol=2e-2)
    print("KERNEL_OK")
</pallas_src>

<mosaic_0001>
module attributes {stable_mosaic.version = 11 : i64} {
  func.func @_patch_embed_kernel(%arg0: i32, %arg1: memref<8x64xbf16, #tpu.memory_space<vmem>>, %arg2: memref<64x32xbf16, #tpu.memory_space<vmem>>, %arg3: memref<1x32xf32, #tpu.memory_space<vmem>>, %arg4: memref<8x32xbf16, #tpu.memory_space<vmem>>) attributes {dimension_semantics = [#tpu.dimension_semantics<parallel>], iteration_bounds = array<i64: 4>, scalar_prefetch = 0 : i64, scratch_operands = 0 : i64, tpu.core_type = #tpu.core_type<tc>, window_params = [{transform_indices = @transform_0, window_bounds = array<i64: 8, 64>}, {pipeline_mode = #tpu.pipeline_mode<synchronous>, transform_indices = @transform_1, window_bounds = array<i64: 64, 32>}, {pipeline_mode = #tpu.pipeline_mode<synchronous>, transform_indices = @transform_2, window_bounds = array<i64: 1, 32>}, {transform_indices = @transform_3, window_bounds = array<i64: 8, 32>}]} {
    %c0 = arith.constant 0 : index
    %c0_0 = arith.constant 0 : index
    %0 = vector.load %arg1[%c0, %c0_0] : memref<8x64xbf16, #tpu.memory_space<vmem>>, vector<8x64xbf16>
    %c0_1 = arith.constant 0 : index
    %c0_2 = arith.constant 0 : index
    %1 = vector.load %arg2[%c0_1, %c0_2] : memref<64x32xbf16, #tpu.memory_space<vmem>>, vector<64x32xbf16>
    %cst = arith.constant dense<0.000000e+00> : vector<8x32xf32>
    %2 = tpu.matmul %0, %1, %cst {dimension_numbers = #tpu.dot_dimension_numbers<[1], [0], [0], [1], [0, 0, 1, 1], [], []>} : vector<8x64xbf16>, vector<64x32xbf16>, vector<8x32xf32> -> vector<8x32xf32>
    %c0_3 = arith.constant 0 : index
    %c0_4 = arith.constant 0 : index
    %3 = vector.load %arg3[%c0_3, %c0_4] : memref<1x32xf32, #tpu.memory_space<vmem>>, vector<1x32xf32>
    %4 = vector.broadcast %3 : vector<1x32xf32> to vector<8x32xf32>
    %5 = arith.addf %2, %4 : vector<8x32xf32>
    %6 = arith.truncf %5 : vector<8x32xf32> to vector<8x32xbf16>
    %c0_5 = arith.constant 0 : index
    %c0_6 = arith.constant 0 : index
    %7 = vector.load %arg4[%c0_5, %c0_6] : memref<8x32xbf16, #tpu.memory_space<vmem>>, vector<8x32xbf16>
    tpu.vector_store %arg4[%c0_5, %c0_6], %6 {strides = array<i32>} : memref<8x32xbf16, #tpu.memory_space<vmem>>, vector<8x32xbf16>,
    return
  }
  func.func @transform_0(%arg0: i32) -> (i32, i32) {
    %c0_i32 = arith.constant 0 : i32
    %c0_i32_0 = arith.constant 0 : i32
    return %arg0, %c0_i32 : i32, i32
  }
  func.func @transform_1(%arg0: i32) -> (i32, i32) {
    %c0_i32 = arith.constant 0 : i32
    %c0_i32_0 = arith.constant 0 : i32
    %c0_i32_1 = arith.constant 0 : i32
    return %c0_i32, %c0_i32_0 : i32, i32
  }
  func.func @transform_2(%arg0: i32) -> (i32, i32) {
    %c0_i32 = arith.constant 0 : i32
    %c0_i32_0 = arith.constant 0 : i32
    %c0_i32_1 = arith.constant 0 : i32
    return %c0_i32, %c0_i32_0 : i32, i32
  }
  func.func @transform_3(%arg0: i32) -> (i32, i32) {
    %c0_i32 = arith.constant 0 : i32
    %c0_i32_0 = arith.constant 0 : i32
    return %arg0, %c0_i32 : i32, i32
  }
}

</mosaic_0001>

<llo_original>
// kernel: patch_embedding_forward.1
$region0: #{patch_embedding_forward.1}
  #allocation0 [shape = 'u32[]', space=smem, size = 0x4, offset = 0x4, fixed_abs, tag = 'smem constant byte address 0x4 - core index']
  #allocation1 [shape = 'u32[144,128]{1,0:T(1,128)}', space=vmem, size = 0x12000, scoped, tag = 'internal scratch']
  %s0 = inlined_call_operand.vmem [shape: bf16[32,64], index: 0, kind: input, shape index: {}]
  %s1 = inlined_call_operand.vmem [shape: bf16[64,32], index: 1, kind: input, shape index: {}]
  %s2 = inlined_call_operand.vmem [shape: f32[1,32], index: 2, kind: input, shape index: {}]
  %s3 = inlined_call_operand.hbm [shape: bf16[32,32], index: 3, kind: output, shape index: {}]
  %s4 = sld [smem:[#allocation0]]
  $region45: #{patch_embedding_forward.1} parent=0
    _
  %s6 = ssub.s32 1, %s4
  %s7 = scalar_select 0, %s6, %s4
  $region1: #{patch_embedding_forward.1} parent=0
    #allocation2 [shape = 'u8[4096]{0}', space=vmem, size = 0x1000, scoped, tag = 'output window, operand 0']
    #allocation3 [shape = 's32[2]{0}', space=sflag, size = 0x8, scoped, tag = 'scoped memory for patch_embedding_forward.1']
    %8 = vsyncpa [#allocation3], 0
    %s9 = scalar_lea.sflag [#allocation3], 1
    %10 = vsyncpa %s9, 0
    loop: start=0, step=1, limit=6
    $region2: #{patch_embedding_forward.1} parent=1 // loop_pre_header
      _
    $region3: #{patch_embedding_forward.1} parent=1 // loop_header
      %s12 = sphi 0, %s16
      %p13 = scmp.ge.s32.totalorder %s12, 6
      %s22 = sphi 0, %s24
      %s25 = sphi 0, %s22
      %s26 = sphi 0, %s25
      %s42 = sphi 0, %s26
      %s46 = sphi 0, %s46
      %s48 = sphi 0, %s46
      %s49 = sphi 0, %s48
      %s63 = sphi 0, %s49
      %s67 = sphi 0, %s67
      %s69 = sphi 0, %s67
      %s70 = sphi 0, %s69
      %s84 = sphi 0, %s70
      %s90 = sphi 0, %s92
      %s93 = sphi 0, %s90
      %s94 = sphi 0, %s93
      %s110 = sphi 0, %s94
    $region4: #{patch_embedding_forward.1} parent=1 // loop_header_branch
      %15 = sbr.rel (%p13) target = $region8
    $region5: #{patch_embedding_forward.1} parent=1 // loop_body
      %s17 = ssub.s32 %s12, 1
      %s18 = ssub.s32 %s12, 2
      %s19 = sadd.s32 %s12, 1
      %s20 = ssub.s32 %s12, %s19
      %p21 = scmp.eq.s32.totalorder %s20, 0
      %s23 = sadd.s32 %s22, 1
      %s24 = scalar_select %p21, %s22, %s23
      %p27 = pneg %p21
      %p28 = scmp.eq.s32.totalorder %s12, 3
      %p29 = por %p27, %p28
      %p30 = scmp.ne.s32.totalorder %s22, %s25
      %p31 = scmp.eq.s32.totalorder %s12, 0
      %p32 = por %p30, %p31
      %p33 = scmp.ne.s32.totalorder %s22, %s25
      %p34 = scmp.eq.s32.totalorder %s17, 3
      %p35 = por %p33, %p34
      %p36 = scmp.ne.s32.totalorder %s25, %s26
      %p37 = scmp.eq.s32.totalorder %s17, 0
      %p38 = por %p36, %p37
      %p39 = scmp.ne.s32.totalorder %s25, %s26
      %p40 = scmp.eq.s32.totalorder %s18, 3
      %p41 = por %p39, %p40
      %p43 = scmp.ne.s32.totalorder %s26, %s42
      %p44 = scmp.eq.s32.totalorder %s18, 0
      %p45 = por %p43, %p44
      %s47 = sadd.s32 %s46, 1
      %p50 = scmp.eq.s32.totalorder %s12, 3
      %p51 = scmp.ne.s32.totalorder %s46, %s48
      %p52 = scmp.eq.s32.totalorder %s12, 0
      %p53 = por %p51, %p52
      %p54 = scmp.ne.s32.totalorder %s46, %s48
      %p55 = scmp.eq.s32.totalorder %s17, 3
      %p56 = por %p54, %p55
      %p57 = scmp.ne.s32.totalorder %s48, %s49
      %p58 = scmp.eq.s32.totalorder %s17, 0
      %p59 = por %p57, %p58
      %p60 = scmp.ne.s32.totalorder %s48, %s49
      %p61 = scmp.eq.s32.totalorder %s18, 3
      %p62 = por %p60, %p61
      %p64 = scmp.ne.s32.totalorder %s49, %s63
      %p65 = scmp.eq.s32.totalorder %s18, 0
      %p66 = por %p64, %p65
      %s68 = sadd.s32 %s67, 1
      %p71 = scmp.eq.s32.totalorder %s12, 3
      %p72 = scmp.ne.s32.totalorder %s67, %s69
      %p73 = scmp.eq.s32.totalorder %s12, 0
      %p74 = por %p72, %p73
      %p75 = scmp.ne.s32.totalorder %s67, %s69
      %p76 = scmp.eq.s32.totalorder %s17, 3
      %p77 = por %p75, %p76
      %p78 = scmp.ne.s32.totalorder %s69, %s70
      %p79 = scmp.eq.s32.totalorder %s17, 0
      %p80 = por %p78, %p79
      %p81 = scmp.ne.s32.totalorder %s69, %s70
      %p82 = scmp.eq.s32.totalorder %s18, 3
      %p83 = por %p81, %p82
      %p85 = scmp.ne.s32.totalorder %s70, %s84
      %p86 = scmp.eq.s32.totalorder %s18, 0
      %p87 = por %p85, %p86
      %s88 = ssub.s32 %s12, %s19
      %p89 = scmp.eq.s32.totalorder %s88, 0
      %s91 = sadd.s32 %s90, 1
      %s92 = scalar_select %p89, %s90, %s91
      %p95 = pneg %p89
      %p96 = scmp.eq.s32.totalorder %s12, 3
      %p97 = por %p95, %p96
      %p98 = scmp.ne.s32.totalorder %s90, %s93
      %p99 = scmp.eq.s32.totalorder %s12, 0
      %p100 = por %p98, %p99
      %p101 = scmp.ne.s32.totalorder %s90, %s93
      %p102 = scmp.eq.s32.totalorder %s17, 3
      %p103 = por %p101, %p102
      %p104 = scmp.ne.s32.totalorder %s93, %s94
      %p105 = scmp.eq.s32.totalorder %s17, 0
      %p106 = por %p104, %p105
      %p107 = scmp.ne.s32.totalorder %s93, %s94
      %p108 = scmp.eq.s32.totalorder %s18, 3
      %p109 = por %p107, %p108
      %p111 = scmp.ne.s32.totalorder %s94, %s110
      %p112 = scmp.eq.s32.totalorder %s18, 0
      %p113 = por %p111, %p112
      %p114 = scmp.le.s32.totalorder 1, %s12
      %p115 = scmp.lt.s32.totalorder %s12, 5
      %p116 = pnand %p114, %p115
      %p117 = pneg %p116
      // Predicated region
      $region9: #{patch_embedding_forward.1} parent=5 // pred_check
        _
      $region10: #{patch_embedding_forward.1} parent=5 // pred_check_branch
        %119 = sbr.rel (%p116) target = $region12
      $region11: #{patch_embedding_forward.1} parent=5 // pred_region
        %s120 = ssub.s32 %s12, 1
        // Predicated region
        $region13: #{patch_embedding_forward.1} parent=11 // pred_check
          %p121 = pneg %p59
        $region14: #{patch_embedding_forward.1} parent=11 // pred_check_branch
          %123 = sbr.rel (%p121) target = $region16
        $region15: #{patch_embedding_forward.1} parent=11 // pred_region
          _
        $region16: #{patch_embedding_forward.1} parent=11 // pred_fallthru
          _
        // Predicated region
        $region17: #{patch_embedding_forward.1} parent=11 // pred_check
          %p124 = pneg %p80
        $region18: #{patch_embedding_forward.1} parent=11 // pred_check_branch
          %126 = sbr.rel (%p124) target = $region20
        $region19: #{patch_embedding_forward.1} parent=11 // pred_region
          _
        $region20: #{patch_embedding_forward.1} parent=11 // pred_fallthru
          _
      $region12: #{patch_embedding_forward.1} parent=5 // pred_fallthru
        _
      %p127 = scmp.lt.s32.totalorder %s12, 4
      // Predicated region
      $region21: #{patch_embedding_forward.1} parent=5 // pred_check
        %p128 = pneg %p127
      $region22: #{patch_embedding_forward.1} parent=5 // pred_check_branch
        %130 = sbr.rel (%p128) target = $region24
      $region23: #{patch_embedding_forward.1} parent=5 // pred_region
        // Predicated region
        $region25: #{patch_embedding_forward.1} parent=23 // pred_check
          %p131 = pneg %p32
        $region26: #{patch_embedding_forward.1} parent=23 // pred_check_branch
          %133 = sbr.rel (%p131) target = $region28
        $region27: #{patch_embedding_forward.1} parent=23 // pred_region
          %p134 = scmp.lt.s32.totalorder %s12, 3
          %s135 = scalar_select %p134, %s12, 3
          %s136 = smul.addr %s135, 4
          %s137 = scalar_lea.vmem %s0, %s136
        $region28: #{patch_embedding_forward.1} parent=23 // pred_fallthru
          _
      $region24: #{patch_embedding_forward.1} parent=5 // pred_fallthru
        _
      %p138 = scmp.le.s32.totalorder 1, %s12
      %p139 = scmp.lt.s32.totalorder %s12, 5
      %p140 = pnand %p138, %p139
      %p141 = pneg %p140
      // Predicated region
      $region29: #{patch_embedding_forward.1} parent=5 // pred_check
        _
      $region30: #{patch_embedding_forward.1} parent=5 // pred_check_branch
        %143 = sbr.rel (%p140) target = $region32
      $region31: #{patch_embedding_forward.1} parent=5 // pred_region
        %s144 = ssub.s32 %s12, 1
        %p145 = scmp.lt.s32.totalorder %s17, 3
        %s146 = scalar_select %p145, %s17, 3
        %s147 = smul.addr %s146, 4
        %s148 = scalar_lea.vmem %s0, %s147
        %p149 = pneg %p38
        %p150 = pneg %p35
        %p151 = pneg %p59
        %p152 = pneg %p56
        %p153 = pneg %p80
        %p154 = pneg %p77
        %p155 = pneg %p106
        %p156 = pneg %p103
        %s157 = sand.u32 %s93, 1
        %s158 = scalar_lea.sflag [#allocation3], %s157
        %s159 = sand.u32 %s93, 1
        %s160 = smul.addr %s159, 4
        %s161 = scalar_lea.vmem [#allocation2], %s160
        %p162 = scmp.lt.s32.totalorder %s17, 3
        %s163 = scalar_select %p162, %s17, 3
        %s164 = smul.addr %s163, 4
        %s165 = scalar_lea.vmem %s0, %s164
        %v167 = vld [vmem:[%s165] sm:$0xf]
        %v168 = vld [vmem:[%s1] sm:$0xf]
        %v169 = vld [vmem:[%s1 + $0x4] sm:$0xf]
        %v170 = vld [vmem:[%s1 + $0x8] sm:$0xf]
        %v171 = vld [vmem:[%s1 + $0xc] sm:$0xf]
        %v172 = vld [vmem:[%s1 + $0x10] sm:$0xf]
        %v173 = vld [vmem:[%s1 + $0x14] sm:$0xf]
        %v174 = vld [vmem:[%s1 + $0x18] sm:$0xf]
        %v175 = vld [vmem:[%s1 + $0x1c] sm:$0xf]
        %v176 = vld [vmem:[%s2] sm:$0x1]
        %v178 = vlaneseq
        %v179 = vshrl.u32 %v178, 7
        %v180 = vsub.s32 0, %v179
        %v181 = vrot.slane %v176, %v180
        %v191 = vunpack.c.l.b16 %v168
        %v192 = vunpack.c.l.b16 %v169
        %v193 = vunpack.c.l.b16 %v170
        %v194 = vunpack.c.l.b16 %v171
        %v195 = vunpack.c.l.b16 %v172
        %v196 = vunpack.c.l.b16 %v173
        %v197 = vunpack.c.l.b16 %v174
        %v198 = vunpack.c.l.b16 %v175
        %v199 = vpack.c.b16 %v192, %v191
        %v200 = vpack.c.b16 %v194, %v193
        %v201 = vpack.c.b16 %v196, %v195
        %v202 = vpack.c.b16 %v198, %v197
        %vm207 = vcmask 523264
        %v209 = vsel %vm207, %v167, 0
        %211 = vmatprep.subr.bf16.mxu0 0
        %212 = vmatpush1.bf16.msra.mxu0 %v199
        %213 = vmatprep.subr.bf16.mxu0 0
        %214 = vmatpush1.bf16.msra.mxu0 %v200
        %215 = vmatprep.subr.bf16.mxu0 0
        %216 = vmatpush1.bf16.msra.mxu0 %v201
        %217 = vmatprep.subr.bf16.mxu0 0
        %218 = vmatpush1.bf16.msra.mxu0 %v202
        %219 = vmatprep.subr.bf16.mxu0 0
        %220 = vmatpush1.bf16.msra.mxu0 0
        %221 = vmatprep.subr.bf16.mxu0 0
        %222 = vmatpush1.bf16.msra.mxu0 0
        %223 = vmatprep.subr.bf16.mxu0 0
        %224 = vmatpush1.bf16.msra.mxu0 0
        %225 = vmatprep.subr.bf16.mxu0 0
        %226 = vmatpush1.bf16.msra.mxu0 0
        %227 = vmatprep.subr.bf16.mxu0 0
        %228 = vmatpush1.bf16.msra.mxu0 0
        %229 = vmatprep.subr.bf16.mxu0 0
        %230 = vmatpush1.bf16.msra.mxu0 0
        %231 = vmatprep.subr.bf16.mxu0 0
        %232 = vmatpush1.bf16.msra.mxu0 0
        %233 = vmatprep.subr.bf16.mxu0 0
        %234 = vmatpush1.bf16.msra.mxu0 0
        %235 = vmatprep.subr.bf16.mxu0 0
        %236 = vmatpush1.bf16.msra.mxu0 0
        %237 = vmatprep.subr.bf16.mxu0 0
        %238 = vmatpush1.bf16.msra.mxu0 0
        %239 = vmatprep.subr.bf16.mxu0 0
        %240 = vmatpush1.bf16.msra.mxu0 0
        %241 = vmatprep.subr.bf16.mxu0 0
        %242 = vmatpush1.bf16.msra.mxu0 0
        %243 = vmatprep.mubr.bf16.mxu0 0
        %244 = vmatmul.mubr.bf16.gmra.mrb[0].mxu0 %v209
        %v245 = vpop.f32.mrb[0].mxu0
        %v246 = vadd.f32 %v181, %v245
        %v247 = vpop.f32.mrb[0].mxu0
        %v248 = vpop.f32.mrb[0].mxu0
        %v249 = vpop.f32.mrb[0].mxu0
        %250 = vdwg.mxu0
        %v251 = vpack.c.bf16 %v246, %v246
        %vm252 = vcmask 257024
        %253 = vst.msk [vmem:[%s161] sm:$0xf] %vm252, %v251
        %s254 = sand.u32 %s93, 1
        %s255 = scalar_lea.sflag [#allocation3], %s254
        %s256 = sand.u32 %s93, 1
        %s257 = smul.addr %s256, 4
        %s258 = scalar_lea.vmem [#allocation2], %s257
        // Predicated region
        $region33: #{patch_embedding_forward.1} parent=31 // pred_check
          %p259 = pneg %p103
        $region34: #{patch_embedding_forward.1} parent=31 // pred_check_branch
          %261 = sbr.rel (%p259) target = $region36
        $region35: #{patch_embedding_forward.1} parent=31 // pred_region
          %s263 = ssub.s32 64, 64
          %264 = vsyncadd %s255, %s263
          %s265 = smul.addr %s17, 64
          %s266 = scalar_lea.hbm %s3, %s265
          %s268 = sshll.u32 %s258, 4
          %s269 = int_to_ptr.vmem [resolvable:$true] %s268
          %271 = dma.vmem_to_hbm [thread:$0]  %s269, 64, %s266, %s255
        $region36: #{patch_embedding_forward.1} parent=31 // pred_fallthru
          _
      $region32: #{patch_embedding_forward.1} parent=5 // pred_fallthru
        _
      %p272 = scmp.le.s32.totalorder 2, %s12
      // Predicated region
      $region37: #{patch_embedding_forward.1} parent=5 // pred_check
        %p273 = pneg %p272
      $region38: #{patch_embedding_forward.1} parent=5 // pred_check_branch
        %275 = sbr.rel (%p273) target = $region40
      $region39: #{patch_embedding_forward.1} parent=5 // pred_region
        %s276 = ssub.s32 %s12, 2
        // Predicated region
        $region41: #{patch_embedding_forward.1} parent=39 // pred_check
          %p277 = pneg %p109
        $region42: #{patch_embedding_forward.1} parent=39 // pred_check_branch
          %279 = sbr.rel (%p277) target = $region44
        $region43: #{patch_embedding_forward.1} parent=39 // pred_region
          %s280 = sand.u32 %s94, 1
          %s281 = scalar_lea.sflag [#allocation3], %s280
          %s282 = sand.u32 %s94, 1
          %s283 = smul.addr %s282, 4
          %s284 = scalar_lea.vmem [#allocation2], %s283
          %285 = dma.done %s281, 64
        $region44: #{patch_embedding_forward.1} parent=39 // pred_fallthru
          _
      $region40: #{patch_embedding_forward.1} parent=5 // pred_fallthru
        _
    $region6: #{patch_embedding_forward.1} parent=1 // loop_footer
      %s16 = sadd.s32 1, %s12
    $region7: #{patch_embedding_forward.1} parent=1 // loop_footer_branch
      %11 = sbr.rel target = $region3
    $region8: #{patch_embedding_forward.1} parent=1 // loop_exit
      _
    %286 = vsyncpa [#allocation3], 1
    %s287 = scalar_lea.sflag [#allocation3], 1
    %288 = vsyncpa %s287, 1

</llo_original>
